<compile_context>
chip_gen: v7x
topology: tpu7x:2x2x1
jax: 0.10.0
libtpu: 0.0.40
codegen_flags: <defaults>
</compile_context>

<pallas_src>
import functools
import math

import numpy as np
import jax
import jax.numpy as jnp
from jax.experimental import pallas as pl
from jax.experimental.pallas import tpu as pltpu

# One weight tile (single buffer) stays at/below this size so the
# double-buffered pair is ~16 MiB: comfortable on v5e/v6e (128 MiB VMEM) and
# v7x (64 MiB VMEM per TensorCore).
_WEIGHT_TILE_BUDGET_BYTES = 8 * 1024 * 1024
_TN_CANDIDATES = (2048, 1024, 512, 256, 128)
_TK_CANDIDATES = (4096, 2048, 1024, 512, 256, 128)


def _apply_activation(y, activation):
    if activation == "relu":
        return jnp.maximum(y, 0.0)
    if activation == "tanh":
        return jnp.tanh(y)
    return y


def _linear_kernel_fullk(x_ref, w_ref, b_ref, o_ref, *, activation):
    """One (M, tn) output tile of y = act(x @ W + b); whole K resident."""
    y = jnp.dot(x_ref[...], w_ref[...], preferred_element_type=jnp.float32)
    y = _apply_activation(y + b_ref[...], activation)
    o_ref[...] = y.astype(o_ref.dtype)


def _linear_kernel_ktiled(x_ref, w_ref, b_ref, o_ref, acc_ref, *, activation):
    """Fallback: accumulate over a tiled K axis (innermost, 'arbitrary')."""
    @pl.when(pl.program_id(1) == 0)
    def _init():
        acc_ref[...] = jnp.zeros_like(acc_ref)

    acc_ref[...] += jnp.dot(
        x_ref[...], w_ref[...], preferred_element_type=jnp.float32)

    @pl.when(pl.program_id(1) == pl.num_programs(1) - 1)
    def _finalize():
        y = _apply_activation(acc_ref[...] + b_ref[...], activation)
        o_ref[...] = y.astype(o_ref.dtype)


def _pick_tile(dim, candidates):
    for c in candidates:
        if c <= dim and dim % c == 0:
            return c
    # Unaligned dim: fall back to the full dimension (legal BlockSpec); only
    # hit for small / odd shapes, so it cannot blow VMEM at the real sizes.
    return dim


def _select_tiles(K, N, weight_itemsize, budget):
    """Pick (tk, tn).  Prefer tk == K (no reduction grid axis)."""
    for tn in _TN_CANDIDATES:
        if N % tn == 0 and K * tn * weight_itemsize <= budget:
            return K, tn
    # Could not keep all of K resident under the budget: tile K as well.
    tn = _pick_tile(N, _TN_CANDIDATES)
    for tk in _TK_CANDIDATES:
        if K % tk == 0 and tk * tn * weight_itemsize <= budget:
            return tk, tn
    return _pick_tile(K, (128,)), tn


def fused_linear(x, w, b, activation, out_dtype,
                 weight_tile_budget_bytes=_WEIGHT_TILE_BUDGET_BYTES):
    """y = activation(x @ w + b), one fused pallas_call.

    x: (M, K) bf16 activations, w: (K, N) bf16 pre-transposed weights,
    b: (1, N) f32 bias.  The batch (M) stays resident; N is the leading
    "parallel" grid axis (megacore shards the weight stream on v7x); K is
    either fully resident (preferred) or the innermost "arbitrary" axis.
    """
    M, K = x.shape
    Kw, N = w.shape
    assert K == Kw and b.shape == (1, N)

    w_itemsize = np.dtype(w.dtype).itemsize
    x_itemsize = np.dtype(x.dtype).itemsize
    o_itemsize = np.dtype(out_dtype).itemsize

    tk, tn = _select_tiles(K, N, w_itemsize, weight_tile_budget_bytes)
    num_n, num_k = N // tn, K // tk

    # Rough VMEM need: double-buffered x / w / bias / out tiles + f32 acc.
    tile_bytes = (M * tk * x_itemsize + tk * tn * w_itemsize
                  + tn * 4 + M * tn * o_itemsize)
    need = 2 * tile_bytes + M * tn * 4 + (4 << 20)
    vmem_limit = int(min(max(need, 32 << 20), 48 << 20))

    cost = pl.CostEstimate(
        flops=2 * M * K * N,
        transcendentals=M * N if activation == "tanh" else 0,
        bytes_accessed=(M * K * x_itemsize + K * N * w_itemsize
                        + N * 4 + M * N * o_itemsize))

    out_shape = jax.ShapeDtypeStruct((M, N), out_dtype)

    if num_k == 1:
        # Whole reduction resident: no accumulator, no pl.when branches.
        kernel = functools.partial(_linear_kernel_fullk, activation=activation)
        grid_spec = pltpu.PrefetchScalarGridSpec(
            num_scalar_prefetch=0,
            grid=(num_n,),
            in_specs=[
                pl.BlockSpec((M, K), lambda j: (0, 0)),    # activations (resident)
                pl.BlockSpec((K, tn), lambda j: (0, j)),   # weight column tile
                pl.BlockSpec((1, tn), lambda j: (0, j)),   # bias row
            ],
            out_specs=pl.BlockSpec((M, tn), lambda j: (0, j)),
            scratch_shapes=[],
        )
        dim_sem = ("parallel",)
    else:
        kernel = functools.partial(_linear_kernel_ktiled, activation=activation)
        grid_spec = pltpu.PrefetchScalarGridSpec(
            num_scalar_prefetch=0,
            grid=(num_n, num_k),                 # reduction axis innermost
            in_specs=[
                pl.BlockSpec((M, tk), lambda j, k: (0, k)),
                pl.BlockSpec((tk, tn), lambda j, k: (k, j)),
                pl.BlockSpec((1, tn), lambda j, k: (0, j)),
            ],
            out_specs=pl.BlockSpec((M, tn), lambda j, k: (0, j)),
            scratch_shapes=[pltpu.VMEM((M, tn), jnp.float32)],
        )
        dim_sem = ("parallel", "arbitrary")

    return pl.pallas_call(
        kernel,
        out_shape=out_shape,
        grid_spec=grid_spec,
        compiler_params=pltpu.CompilerParams(
            dimension_semantics=dim_sem,
            vmem_limit_bytes=vmem_limit),
        cost_estimate=cost,
    )(x, w, b)


def image_reconstruction_mlp_forward(image_features, params, *,
                                     channels=3, height=16, width=16,
                                     weight_tile_budget_bytes=_WEIGHT_TILE_BUDGET_BYTES):
    """image_features: (B, input_dim) -> reconstructed image (B, C, H, W)."""
    x = image_features.astype(jnp.bfloat16)   # single cast; weights already bf16
    n_layers = len(params["weights"])
    for i, (w, b) in enumerate(zip(params["weights"], params["biases"])):
        last = i == n_layers - 1
        x = fused_linear(
            x, w, b,
            activation="tanh" if last else "relu",
            out_dtype=jnp.float32 if last else jnp.bfloat16,
            weight_tile_budget_bytes=weight_tile_budget_bytes)
    batch = image_features.shape[0]
    return x.reshape(batch, channels, height, width)


def image_reconstruction_mlp_reference(image_features, params):
    """Pure-JAX f32 reference mirroring the PyTorch forward (flat output)."""
    x = image_features.astype(jnp.float32)
    n_layers = len(params["weights"])
    for i, (w, b) in enumerate(zip(params["weights"], params["biases"])):
        x = x @ w.astype(jnp.float32) + b[0].astype(jnp.float32)
        x = jnp.maximum(x, 0.0) if i < n_layers - 1 else jnp.tanh(x)
    return x


def init_params(key, input_dim, hidden_dims, output_dim):
    """nn.Linear-style init; weights pre-transposed (in, out) in bf16, bias (1, out) f32."""
    dims = [input_dim] + list(hidden_dims) + [output_dim]
    weights, biases = [], []
    keys = jax.random.split(key, 2 * (len(dims) - 1))
    for layer in range(len(dims) - 1):
        fan_in, fan_out = dims[layer], dims[layer + 1]
        bound = 1.0 / math.sqrt(fan_in)
        w = jax.random.uniform(keys[2 * layer], (fan_in, fan_out),
                               jnp.float32, -bound, bound).astype(jnp.bfloat16)
        b = jax.random.uniform(keys[2 * layer + 1], (1, fan_out),
                               jnp.float32, -bound, bound)
        weights.append(w)
        biases.append(b)
    return {"weights": weights, "biases": biases}


if __name__ == "__main__":
    key = jax.random.PRNGKey(0)
    k_params, k_x = jax.random.split(key, 2)

    # SMALL shapes, structurally consistent with the module (3 hidden layers,
    # ReLU between, Tanh at the end, reshape to (B, 3, H, W)).  The real module
    # (512 -> 1024 -> 2048 -> 4096 -> 3*224*224) is handled identically: all
    # dims are multiples of 128 and the final layer takes the collapsed-K path
    # with tn=1024 bf16 weight tiles.
    batch = 8
    input_dim = 128
    hidden_dims = [256, 384, 512]
    channels, height, width = 3, 16, 16
    output_dim = channels * height * width        # 768

    params = init_params(k_params, input_dim, hidden_dims, output_dim)
    image_features = jax.random.normal(k_x, (batch, input_dim), jnp.float32)

    out = image_reconstruction_mlp_forward(
        image_features, params, channels=channels, height=height, width=width)
    out = jax.block_until_ready(out)

    ref = image_reconstruction_mlp_reference(image_features, params)
    ref = ref.reshape(batch, channels, height, width)

    assert out.shape == (batch, channels, height, width)
    # bf16 activations/weights with f32 accumulation: loosened tolerance.
    assert jnp.allclose(out, ref, atol=3e-2, rtol=3e-2), (
        float(jnp.max(jnp.abs(out - ref))))

    # Also exercise the K-tiled accumulator fallback path (forced by a tiny
    # weight-tile budget); at the real shapes the collapsed-K path is taken.
    out_acc = image_reconstruction_mlp_forward(
        image_features, params, channels=channels, height=height, width=width,
        weight_tile_budget_bytes=16 * 1024)
    out_acc = jax.block_until_ready(out_acc)
    assert jnp.allclose(out_acc, ref, atol=3e-2, rtol=3e-2), (
        float(jnp.max(jnp.abs(out_acc - ref))))

    print("KERNEL_OK")
</pallas_src>

<mosaic_0001>
module attributes {stable_mosaic.version = 11 : i64} {
  func.func @_linear_kernel_fullk(%arg0: i32, %arg1: memref<8x128xbf16, #tpu.memory_space<vmem>>, %arg2: memref<128x256xbf16, #tpu.memory_space<vmem>>, %arg3: memref<1x256xf32, #tpu.memory_space<vmem>>, %arg4: memref<8x256xbf16, #tpu.memory_space<vmem>>) attributes {dimension_semantics = [#tpu.dimension_semantics<parallel>], iteration_bounds = array<i64: 1>, scalar_prefetch = 0 : i64, scratch_operands = 0 : i64, tpu.core_type = #tpu.core_type<tc>, window_params = [{pipeline_mode = #tpu.pipeline_mode<synchronous>, transform_indices = @transform_0, window_bounds = array<i64: 8, 128>}, {transform_indices = @transform_1, window_bounds = array<i64: 128, 256>}, {transform_indices = @transform_2, window_bounds = array<i64: 1, 256>}, {transform_indices = @transform_3, window_bounds = array<i64: 8, 256>}]} {
    %c0 = arith.constant 0 : index
    %c0_0 = arith.constant 0 : index
    %0 = vector.load %arg1[%c0, %c0_0] : memref<8x128xbf16, #tpu.memory_space<vmem>>, vector<8x128xbf16>
    %c0_1 = arith.constant 0 : index
    %c0_2 = arith.constant 0 : index
    %1 = vector.load %arg2[%c0_1, %c0_2] : memref<128x256xbf16, #tpu.memory_space<vmem>>, vector<128x256xbf16>
    %cst = arith.constant dense<0.000000e+00> : vector<8x256xf32>
    %2 = tpu.matmul %0, %1, %cst {dimension_numbers = #tpu.dot_dimension_numbers<[1], [0], [0], [1], [0, 0, 1, 1], [], []>} : vector<8x128xbf16>, vector<128x256xbf16>, vector<8x256xf32> -> vector<8x256xf32>
    %c0_3 = arith.constant 0 : index
    %c0_4 = arith.constant 0 : index
    %3 = vector.load %arg3[%c0_3, %c0_4] : memref<1x256xf32, #tpu.memory_space<vmem>>, vector<1x256xf32>
    %4 = vector.broadcast %3 : vector<1x256xf32> to vector<8x256xf32>
    %5 = arith.addf %2, %4 : vector<8x256xf32>
    %cst_5 = arith.constant 0.000000e+00 : f32
    %6 = vector.broadcast %cst_5 : f32 to vector<8x256xf32>
    %7 = arith.maximumf %5, %6 : vector<8x256xf32>
    %8 = arith.truncf %7 : vector<8x256xf32> to vector<8x256xbf16>
    %c0_6 = arith.constant 0 : index
    %c0_7 = arith.constant 0 : index
    %9 = vector.load %arg4[%c0_6, %c0_7] : memref<8x256xbf16, #tpu.memory_space<vmem>>, vector<8x256xbf16>
    tpu.vector_store %arg4[%c0_6, %c0_7], %8 {strides = array<i32>} : memref<8x256xbf16, #tpu.memory_space<vmem>>, vector<8x256xbf16>,
    return
  }
  func.func @transform_0(%arg0: i32) -> (i32, i32) {
    %c0_i32 = arith.constant 0 : i32
    %c0_i32_0 = arith.constant 0 : i32
    %c0_i32_1 = arith.constant 0 : i32
    return %c0_i32, %c0_i32_0 : i32, i32
  }
  func.func @transform_1(%arg0: i32) -> (i32, i32) {
    %c0_i32 = arith.constant 0 : i32
    %c0_i32_0 = arith.constant 0 : i32
    return %c0_i32, %arg0 : i32, i32
  }
  func.func @transform_2(%arg0: i32) -> (i32, i32) {
    %c0_i32 = arith.constant 0 : i32
    %c0_i32_0 = arith.constant 0 : i32
    return %c0_i32, %arg0 : i32, i32
  }
  func.func @transform_3(%arg0: i32) -> (i32, i32) {
    %c0_i32 = arith.constant 0 : i32
    %c0_i32_0 = arith.constant 0 : i32
    return %c0_i32, %arg0 : i32, i32
  }
}

</mosaic_0001>

<llo_original>
// kernel: tpu_custom_call.1
$region0: #{tpu_custom_call.1}
  #allocation0 [shape = 'u32[]', space=smem, size = 0x4, offset = 0x4, fixed_abs, tag = 'smem constant byte address 0x4 - core index']
  #allocation1 [shape = 'u32[144,128]{1,0:T(1,128)}', space=vmem, size = 0x12000, scoped, tag = 'internal scratch']
  %s0 = inlined_call_operand.hbm [shape: bf16[8,128], index: 0, kind: input, shape index: {}]
  %s1 = inlined_call_operand.hbm [shape: bf16[128,256], index: 1, kind: input, shape index: {}]
  %s2 = inlined_call_operand.vmem [shape: f32[1,256], index: 2, kind: input, shape index: {}]
  %s3 = inlined_call_operand.hbm [shape: bf16[8,256], index: 3, kind: output, shape index: {}]
  %s4 = sld [smem:[#allocation0]]
  $region30: #{tpu_custom_call.1} parent=0
    _
  %s6 = ssub.s32 1, %s4
  %s7 = scalar_select 0, %s6, %s4
  $region1: #{tpu_custom_call.1} parent=0
    #allocation2 [shape = 'u8[2048]{0}', space=vmem, size = 0x800, scoped, tag = 'input window, operand 0, single buffered']
    #allocation3 [shape = 's32[1]{0}', space=sflag, size = 0x4, scoped, tag = 'scoped memory for tpu_custom_call.1']
    #allocation4 [shape = 's32[1]{0}', space=sflag, size = 0x4, scoped, tag = 'scoped memory for tpu_custom_call.1']
    #allocation5 [shape = 'u8[65536]{0}', space=vmem, size = 0x10000, scoped, tag = 'input window, operand 1, single buffered']
    #allocation6 [shape = 's32[1]{0}', space=sflag, size = 0x4, scoped, tag = 'scoped memory for tpu_custom_call.1']
    #allocation7 [shape = 'u8[4096]{0}', space=vmem, size = 0x1000, scoped, tag = 'output window, operand 0, single buffered']
    %8 = vsyncpa [#allocation3], 0
    %9 = vsyncpa [#allocation6], 0
    %10 = vsyncpa [#allocation4], 0
    // Predicated region
    $region2: #{tpu_custom_call.1} parent=1 // pred_check
      _
    $region3: #{tpu_custom_call.1} parent=1 // pred_check_branch
      %12 = sbr.rel (0) target = $region5
    $region4: #{tpu_custom_call.1} parent=1 // pred_region
      %s14 = ssub.s32 64, 64
      %15 = vsyncadd [#allocation3], %s14
      %s17 = sshll.u32 [#allocation2], 4
      %s18 = int_to_ptr.vmem [resolvable:$true] %s17
      %20 = dma.hbm_to_vmem [thread:$0]  %s0, 64, %s18, [#allocation3]
    $region5: #{tpu_custom_call.1} parent=1 // pred_fallthru
      _
    // Predicated region
    $region6: #{tpu_custom_call.1} parent=1 // pred_check
      _
    $region7: #{tpu_custom_call.1} parent=1 // pred_check_branch
      %22 = sbr.rel (0) target = $region9
    $region8: #{tpu_custom_call.1} parent=1 // pred_region
      %s24 = ssub.s32 2048, 2048
      %25 = vsyncadd [#allocation6], %s24
      %s26 = sshll.u32 [#allocation5], 4
      %s27 = int_to_ptr.vmem [resolvable:$true] %s26
      %32 = dma.hbm_to_vmem [thread:$0]  %s1, 2048, %s27, [#allocation6], 128, 128, 8
    $region9: #{tpu_custom_call.1} parent=1 // pred_fallthru
      _
    // Predicated region
    $region10: #{tpu_custom_call.1} parent=1 // pred_check
      _
    $region11: #{tpu_custom_call.1} parent=1 // pred_check_branch
      %34 = sbr.rel (0) target = $region13
    $region12: #{tpu_custom_call.1} parent=1 // pred_region
      _
    $region13: #{tpu_custom_call.1} parent=1 // pred_fallthru
      _
    // Predicated region
    $region14: #{tpu_custom_call.1} parent=1 // pred_check
      _
    $region15: #{tpu_custom_call.1} parent=1 // pred_check_branch
      %36 = sbr.rel (0) target = $region17
    $region16: #{tpu_custom_call.1} parent=1 // pred_region
      %37 = dma.done [#allocation3], 64
    $region17: #{tpu_custom_call.1} parent=1 // pred_fallthru
      _
    // Predicated region
    $region18: #{tpu_custom_call.1} parent=1 // pred_check
      _
    $region19: #{tpu_custom_call.1} parent=1 // pred_check_branch
      %39 = sbr.rel (0) target = $region21
    $region20: #{tpu_custom_call.1} parent=1 // pred_region
      %40 = dma.done [#allocation6], 2048
    $region21: #{tpu_custom_call.1} parent=1 // pred_fallthru
      _
    %v42 = vld [vmem:[#allocation2] sm:$0xf]
    %v43 = vld [vmem:[#allocation5] sm:$0xff]
    %v44 = vld [vmem:[#allocation5 + $0x8] sm:$0xff]
    %v45 = vld [vmem:[#allocation5 + $0x10] sm:$0xff]
    %v46 = vld [vmem:[#allocation5 + $0x18] sm:$0xff]
    %v47 = vld [vmem:[#allocation5 + $0x20] sm:$0xff]
    %v48 = vld [vmem:[#allocation5 + $0x28] sm:$0xff]
    %v49 = vld [vmem:[#allocation5 + $0x30] sm:$0xff]
    %v50 = vld [vmem:[#allocation5 + $0x38] sm:$0xff]
    %v51 = vld [vmem:[#allocation5 + $0x40] sm:$0xff]
    %v52 = vld [vmem:[#allocation5 + $0x48] sm:$0xff]
    %v53 = vld [vmem:[#allocation5 + $0x50] sm:$0xff]
    %v54 = vld [vmem:[#allocation5 + $0x58] sm:$0xff]
    %v55 = vld [vmem:[#allocation5 + $0x60] sm:$0xff]
    %v56 = vld [vmem:[#allocation5 + $0x68] sm:$0xff]
    %v57 = vld [vmem:[#allocation5 + $0x70] sm:$0xff]
    %v58 = vld [vmem:[#allocation5 + $0x78] sm:$0xff]
    %v59 = vld [vmem:[%s2] sm:$0x3]
    %v61 = vlaneseq
    %v62 = vshrl.u32 %v61, 7
    %v63 = vsub.s32 0, %v62
    %v64 = vrot.slane %v59, %v63
    %v65 = vlaneseq
    %v66 = vshrl.u32 %v65, 7
    %v67 = vsub.s32 1, %v66
    %v68 = vrot.slane %v59, %v67
    %v87 = vunpack.c.l.b16 %v43
    %v88 = vunpack.c.h.b16 %v43
    %v89 = vunpack.c.l.b16 %v44
    %v90 = vunpack.c.h.b16 %v44
    %v91 = vunpack.c.l.b16 %v45
    %v92 = vunpack.c.h.b16 %v45
    %v93 = vunpack.c.l.b16 %v46
    %v94 = vunpack.c.h.b16 %v46
    %v95 = vunpack.c.l.b16 %v47
    %v96 = vunpack.c.h.b16 %v47
    %v97 = vunpack.c.l.b16 %v48
    %v98 = vunpack.c.h.b16 %v48
    %v99 = vunpack.c.l.b16 %v49
    %v100 = vunpack.c.h.b16 %v49
    %v101 = vunpack.c.l.b16 %v50
    %v102 = vunpack.c.h.b16 %v50
    %v103 = vunpack.c.l.b16 %v51
    %v104 = vunpack.c.h.b16 %v51
    %v105 = vunpack.c.l.b16 %v52
    %v106 = vunpack.c.h.b16 %v52
    %v107 = vunpack.c.l.b16 %v53
    %v108 = vunpack.c.h.b16 %v53
    %v109 = vunpack.c.l.b16 %v54
    %v110 = vunpack.c.h.b16 %v54
    %v111 = vunpack.c.l.b16 %v55
    %v112 = vunpack.c.h.b16 %v55
    %v113 = vunpack.c.l.b16 %v56
    %v114 = vunpack.c.h.b16 %v56
    %v115 = vunpack.c.l.b16 %v57
    %v116 = vunpack.c.h.b16 %v57
    %v117 = vunpack.c.l.b16 %v58
    %v118 = vunpack.c.h.b16 %v58
    %v119 = vpack.c.b16 %v89, %v87
    %v120 = vpack.c.b16 %v90, %v88
    %v121 = vpack.c.b16 %v93, %v91
    %v122 = vpack.c.b16 %v94, %v92
    %v123 = vpack.c.b16 %v97, %v95
    %v124 = vpack.c.b16 %v98, %v96
    %v125 = vpack.c.b16 %v101, %v99
    %v126 = vpack.c.b16 %v102, %v100
    %v127 = vpack.c.b16 %v105, %v103
    %v128 = vpack.c.b16 %v106, %v104
    %v129 = vpack.c.b16 %v109, %v107
    %v130 = vpack.c.b16 %v110, %v108
    %v131 = vpack.c.b16 %v113, %v111
    %v132 = vpack.c.b16 %v114, %v112
    %v133 = vpack.c.b16 %v117, %v115
    %v134 = vpack.c.b16 %v118, %v116
    %151 = vmatprep.subr.bf16.mxu0 %v120
    %152 = vmatpush1.bf16.msra.mxu0 %v119
    %153 = vmatprep.subr.bf16.mxu0 %v122
    %154 = vmatpush1.bf16.msra.mxu0 %v121
    %155 = vmatprep.subr.bf16.mxu0 %v124
    %156 = vmatpush1.bf16.msra.mxu0 %v123
    %157 = vmatprep.subr.bf16.mxu0 %v126
    %158 = vmatpush1.bf16.msra.mxu0 %v125
    %159 = vmatprep.subr.bf16.mxu0 %v128
    %160 = vmatpush1.bf16.msra.mxu0 %v127
    %161 = vmatprep.subr.bf16.mxu0 %v130
    %162 = vmatpush1.bf16.msra.mxu0 %v129
    %163 = vmatprep.subr.bf16.mxu0 %v132
    %164 = vmatpush1.bf16.msra.mxu0 %v131
    %165 = vmatprep.subr.bf16.mxu0 %v134
    %166 = vmatpush1.bf16.msra.mxu0 %v133
    %167 = vmatprep.subr.bf16.mxu0 0
    %168 = vmatpush1.bf16.msra.mxu0 0
    %169 = vmatprep.subr.bf16.mxu0 0
    %170 = vmatpush1.bf16.msra.mxu0 0
    %171 = vmatprep.subr.bf16.mxu0 0
    %172 = vmatpush1.bf16.msra.mxu0 0
    %173 = vmatprep.subr.bf16.mxu0 0
    %174 = vmatpush1.bf16.msra.mxu0 0
    %175 = vmatprep.subr.bf16.mxu0 0
    %176 = vmatpush1.bf16.msra.mxu0 0
    %177 = vmatprep.subr.bf16.mxu0 0
    %178 = vmatpush1.bf16.msra.mxu0 0
    %179 = vmatprep.subr.bf16.mxu0 0
    %180 = vmatpush1.bf16.msra.mxu0 0
    %181 = vmatprep.subr.bf16.mxu0 0
    %182 = vmatpush1.bf16.msra.mxu0 0
    %183 = vmatprep.mubr.bf16.mxu0 0
    %184 = vmatmul.mubr.bf16.gmra.mrb[0].mxu0 %v42
    %v185 = vpop.f32.mrb[0].mxu0
    %v186 = vadd.f32 %v64, %v185
    %v187 = vpop.f32.mrb[0].mxu0
    %v188 = vadd.f32 %v68, %v187
    %v189 = vpop.f32.mrb[0].mxu0
    %v190 = vpop.f32.mrb[0].mxu0
    %191 = vdwg.mxu0
    %v192 = vmax.f32 %v186, 0.0
    %v193 = vmax.f32 %v188, 0.0
    %v194 = vpack.c.bf16 %v192, %v192
    %v195 = vpack.c.bf16 %v193, %v193
    %v198 = vunpack.c.l.b16 %v194
    %v199 = vunpack.c.l.b16 %v195
    %v200 = vpack.c.b16 %v199, %v198
    %202 = vst [vmem:[#allocation7] sm:$0xff] %v200
    // Predicated region
    $region22: #{tpu_custom_call.1} parent=1 // pred_check
      _
    $region23: #{tpu_custom_call.1} parent=1 // pred_check_branch
      %204 = sbr.rel (0) target = $region25
    $region24: #{tpu_custom_call.1} parent=1 // pred_region
      %s206 = ssub.s32 128, 128
      %207 = vsyncadd [#allocation4], %s206
      %s209 = sshll.u32 [#allocation7], 4
      %s210 = int_to_ptr.vmem [resolvable:$true] %s209
      %212 = dma.vmem_to_hbm [thread:$0]  %s210, 128, %s3, [#allocation4]
    $region25: #{tpu_custom_call.1} parent=1 // pred_fallthru
      _
    // Predicated region
    $region26: #{tpu_custom_call.1} parent=1 // pred_check
      _
    $region27: #{tpu_custom_call.1} parent=1 // pred_check_branch
      %214 = sbr.rel (0) target = $region29
    $region28: #{tpu_custom_call.1} parent=1 // pred_region
      %215 = dma.done [#allocation4], 128
    $region29: #{tpu_custom_call.1} parent=1 // pred_fallthru
      _
    %216 = vsyncpa [#allocation3], 1
    %217 = vsyncpa [#allocation6], 1
    %218 = vsyncpa [#allocation4], 1

</llo_original>
